<compile_context>
chip_gen: v7x
topology: tpu7x:2x2x1
jax: 0.10.0
libtpu: 0.0.40
codegen_flags: <defaults>
</compile_context>

<pallas_src>
import functools

import jax
import jax.numpy as jnp
from jax.experimental import pallas as pl
from jax.experimental.pallas import tpu as pltpu

LANES = 128


def _tpu_device_kind():
    try:
        dev = jax.devices()[0]
        if dev.platform == "tpu":
            return dev.device_kind.lower()
    except Exception:
        pass
    return ""


def _tuning_for_device():
    """(max_block_rows, nsplit) tuned per TPU generation (safe fallback)."""
    kind = _tpu_device_kind()
    # Chips where a leading "parallel" grid axis shards across 2 TensorCores.
    megacore = any(tag in kind for tag in ("v4", "v5p", "v7", "7x"))
    # Fast-HBM chips amortize per-grid-step overhead with bigger tiles.
    big_hbm = any(tag in kind for tag in ("v6", "v7", "7x"))
    max_block_rows = 8192 if big_hbm else 4096
    nsplit = 2 if megacore else 1
    return max_block_rows, nsplit


# ---------------------------------------------------------------------------
# Small-input fast path: whole arrays in VMEM, full reduce to an SMEM scalar.
# ---------------------------------------------------------------------------
def _mse_scalar_kernel(p_ref, t_ref, out_ref, *, inv_n):
    d = p_ref[...].astype(jnp.float32) - t_ref[...].astype(jnp.float32)
    out_ref[0, 0] = jnp.sum(d * d) * inv_n


# ---------------------------------------------------------------------------
# Large-input streaming path: lane-dense (block_rows, 128) blocks, VMEM
# accumulator, P3 init/finalize, optional megacore split on the leading axis.
# ---------------------------------------------------------------------------
def _mse_partial_kernel(p_ref, t_ref, out_ref, acc_ref, *,
                        block_rows, acc_rows, steps_per_split, rows_total,
                        needs_mask):
    s = pl.program_id(0)   # parallel split index
    j = pl.program_id(1)   # reduction step within this split

    @pl.when(j == 0)
    def _init():
        acc_ref[...] = jnp.zeros_like(acc_ref)

    d = p_ref[...].astype(jnp.float32) - t_ref[...].astype(jnp.float32)
    sq = d * d

    def _fold(vals):
        # Fold the (block_rows, 128) tile onto the (acc_rows, 128) accumulator:
        # pure VPU vreg adds; the expensive cross-sublane/lane reduce happens
        # once in the finalize.
        acc_ref[...] += vals.reshape(block_rows // acc_rows, acc_rows,
                                     LANES).sum(axis=0)

    if needs_mask:
        # Only boundary blocks (partial last block / duplicate clamped blocks)
        # pay the iota + select cost; interior blocks take the unmasked path.
        row0 = (s * steps_per_split + j) * block_rows
        boundary = row0 + block_rows > rows_total

        @pl.when(boundary)
        def _masked():
            gid = row0 + jax.lax.broadcasted_iota(jnp.int32, (block_rows, 1), 0)
            _fold(jnp.where(gid < rows_total, sq, 0.0))

        @pl.when(jnp.logical_not(boundary))
        def _unmasked():
            _fold(sq)
    else:
        _fold(sq)

    @pl.when(j == pl.num_programs(1) - 1)
    def _finalize():
        # Lane-dense (1, 128) per-lane partial sum for this split.
        out_ref[...] = jnp.sum(acc_ref[...], axis=0, keepdims=True)


def mse_loss_pallas(pred, target, *, max_block_rows=None):
    assert pred.shape == target.shape, "pred/target shape mismatch"
    n = pred.size

    cfg_rows, nsplit = _tuning_for_device()
    if max_block_rows is None:
        max_block_rows = cfg_rows

    flat_p = pred.reshape(-1)
    flat_t = target.reshape(-1)
    # Only pad when n is not a multiple of 128 (needed for a rectangular
    # lane-dense slab); zero padding contributes 0 to the SSD.
    # TODO(synk): a 1-D BlockSpec path could avoid even this rare copy.
    if n % LANES != 0:
        pad = LANES - (n % LANES)
        flat_p = jnp.pad(flat_p, (0, pad))
        flat_t = jnp.pad(flat_t, (0, pad))

    rows = pl.cdiv(n, LANES)
    p2 = flat_p.reshape(rows, LANES)
    t2 = flat_t.reshape(rows, LANES)

    cost = pl.CostEstimate(
        flops=3 * n,
        transcendentals=0,
        bytes_accessed=int(pred.dtype.itemsize + target.dtype.itemsize) * n + 4,
    )

    # -------------------- small-input fast path --------------------
    if rows <= max_block_rows:
        kernel = functools.partial(_mse_scalar_kernel, inv_n=1.0 / n)
        out = pl.pallas_call(
            kernel,
            out_shape=jax.ShapeDtypeStruct((1, 1), jnp.float32),
            in_specs=[pl.BlockSpec(memory_space=pltpu.MemorySpace.VMEM),
                      pl.BlockSpec(memory_space=pltpu.MemorySpace.VMEM)],
            out_specs=pl.BlockSpec(memory_space=pltpu.MemorySpace.SMEM),
            cost_estimate=cost,
        )(p2, t2)
        return out[0, 0]

    # -------------------- large-input streaming path --------------------
    block_rows = max_block_rows
    assert block_rows % 8 == 0, "block_rows must be a multiple of 8"

    total_blocks = pl.cdiv(rows, block_rows)          # >= 2 here
    if total_blocks < nsplit:
        nsplit = 1                                    # defensive; shouldn't trigger
    steps_per_split = pl.cdiv(total_blocks, nsplit)
    num_logical_blocks = nsplit * steps_per_split
    # Mask only needed if logical coverage exceeds the real row count
    # (partial last block and/or duplicate clamped blocks).
    needs_mask = (num_logical_blocks * block_rows) != rows

    acc_rows = 32 if block_rows % 32 == 0 else 8

    if needs_mask:
        def in_map(s, j):
            # Clamp so duplicate trailing steps re-read the last valid block
            # (their contribution is zeroed by the in-kernel row mask).
            b = jnp.minimum(s * steps_per_split + j, total_blocks - 1)
            return (b, 0)
    else:
        def in_map(s, j):
            return (s * steps_per_split + j, 0)

    kernel = functools.partial(
        _mse_partial_kernel,
        block_rows=block_rows,
        acc_rows=acc_rows,
        steps_per_split=steps_per_split,
        rows_total=rows,
        needs_mask=needs_mask,
    )

    # Raise the scoped-VMEM ceiling only when the double-buffered pipeline
    # footprint (2 inputs x 2 buffers x block) needs it; stays well under
    # v7x's 64 MiB physical VMEM per TensorCore.
    pipeline_bytes = 2 * 2 * block_rows * LANES * int(p2.dtype.itemsize)
    vmem_limit = (48 * 1024 * 1024) if pipeline_bytes > (12 * 1024 * 1024) else None

    partials = pl.pallas_call(
        kernel,
        out_shape=jax.ShapeDtypeStruct((nsplit, LANES), jnp.float32),
        grid_spec=pltpu.PrefetchScalarGridSpec(
            num_scalar_prefetch=0,
            grid=(nsplit, steps_per_split),
            in_specs=[
                pl.BlockSpec((block_rows, LANES), in_map),
                pl.BlockSpec((block_rows, LANES), in_map),
            ],
            out_specs=pl.BlockSpec((1, LANES), lambda s, j: (s, 0)),
            scratch_shapes=[pltpu.VMEM((acc_rows, LANES), jnp.float32)],
        ),
        compiler_params=pltpu.CompilerParams(
            dimension_semantics=("parallel", "arbitrary"),
            vmem_limit_bytes=vmem_limit,
        ),
        cost_estimate=cost,
    )(p2, t2)

    return jnp.sum(partials) / n


if __name__ == "__main__":
    key = jax.random.PRNGKey(0)
    k1, k2 = jax.random.split(key)

    # Small NCHW shapes consistent with a dense-prediction MSE loss.
    pred = jax.random.normal(k1, (2, 4, 16, 16), dtype=jnp.float32)
    target = jax.random.normal(k2, (2, 4, 16, 16), dtype=jnp.float32)

    loss = mse_loss_pallas(pred, target)
    jax.block_until_ready(loss)
    ref = jnp.mean((pred - target) ** 2)
    assert jnp.allclose(loss, ref, rtol=1e-6, atol=1e-6), (loss, ref)

    # Also exercise the multi-block streaming path (grid, boundary mask,
    # clamped duplicate block) with a small block-size override so it stays
    # tiny: n = 9600 -> 75 rows of 128 lanes, 32-row blocks.
    k3, k4 = jax.random.split(k2)
    pred2 = jax.random.normal(k3, (2, 3, 40, 40), dtype=jnp.float32)
    target2 = jax.random.normal(k4, (2, 3, 40, 40), dtype=jnp.float32)
    loss2 = mse_loss_pallas(pred2, target2, max_block_rows=32)
    jax.block_until_ready(loss2)
    ref2 = jnp.mean((pred2 - target2) ** 2)
    assert jnp.allclose(loss2, ref2, rtol=1e-6, atol=1e-6), (loss2, ref2)

    print("KERNEL_OK")
</pallas_src>

<mosaic_0001>
module attributes {stable_mosaic.version = 11 : i64} {
  func.func @_mse_scalar_kernel(%arg0: memref<16x128xf32, #tpu.memory_space<vmem>>, %arg1: memref<16x128xf32, #tpu.memory_space<vmem>>, %arg2: memref<1x1xf32, #tpu.memory_space<smem>>) attributes {dimension_semantics = [], scalar_prefetch = 0 : i64, scratch_operands = 0 : i64, tpu.core_type = #tpu.core_type<tc>} {
    %c0 = arith.constant 0 : index
    %c0_0 = arith.constant 0 : index
    %0 = vector.load %arg0[%c0, %c0_0] : memref<16x128xf32, #tpu.memory_space<vmem>>, vector<16x128xf32>
    %c0_1 = arith.constant 0 : index
    %c0_2 = arith.constant 0 : index
    %1 = vector.load %arg1[%c0_1, %c0_2] : memref<16x128xf32, #tpu.memory_space<vmem>>, vector<16x128xf32>
    %2 = arith.subf %0, %1 : vector<16x128xf32>
    %3 = arith.mulf %2, %2 : vector<16x128xf32>
    %4 = vector.shape_cast %3 : vector<16x128xf32> to vector<1x16x128xf32>
    %cst = arith.constant dense<0.000000e+00> : vector<1xf32>
    %5 = vector.multi_reduction <add>, %4, %cst [1, 2] : vector<1x16x128xf32> to vector<1xf32>
    %6 = vector.shape_cast %5 : vector<1xf32> to vector<1x1x1xf32>
    %7 = vector.extract %6[0, 0, 0] : f32 from vector<1x1x1xf32>
    %cst_3 = arith.constant 4.8828125E-4 : f32
    %8 = arith.mulf %7, %cst_3 : f32
    %c0_4 = arith.constant 0 : index
    %c0_5 = arith.constant 0 : index
    %9 = memref.load %arg2[%c0_4, %c0_5] : memref<1x1xf32, #tpu.memory_space<smem>>
    memref.store %8, %arg2[%c0_4, %c0_5] : memref<1x1xf32, #tpu.memory_space<smem>>
    return
  }
}

</mosaic_0001>

<llo_original>
// kernel: tpu_custom_call.1
$region0: #{tpu_custom_call.1}
  #allocation0 [shape = 'u32[]', space=smem, size = 0x4, offset = 0x4, fixed_abs, tag = 'smem constant byte address 0x4 - core index']
  #allocation1 [shape = 'u32[144,128]{1,0:T(1,128)}', space=vmem, size = 0x12000, scoped, tag = 'internal scratch']
  %s0 = inlined_call_operand.hbm [shape: f32[16,128], index: 0, kind: input, shape index: {}]
  %s1 = inlined_call_operand.hbm [shape: f32[16,128], index: 1, kind: input, shape index: {}]
  %s2 = inlined_call_operand.hbm [shape: f32[1,1], index: 2, kind: output, shape index: {}]
  %s3 = sld [smem:[#allocation0]]
  $region26: #{tpu_custom_call.1} parent=0
    _
  %s5 = ssub.s32 1, %s3
  %s6 = scalar_select 0, %s5, %s3
  $region1: #{tpu_custom_call.1} parent=0
    #allocation2 [shape = 'u8[8192]{0}', space=vmem, size = 0x2000, scoped, tag = 'input window, operand 0, single buffered']
    #allocation3 [shape = 's32[1]{0}', space=sflag, size = 0x4, scoped, tag = 'scoped memory for tpu_custom_call.1']
    #allocation4 [shape = 's32[1]{0}', space=sflag, size = 0x4, scoped, tag = 'scoped memory for tpu_custom_call.1']
    #allocation5 [shape = 'u8[8192]{0}', space=vmem, size = 0x2000, scoped, tag = 'input window, operand 1, single buffered']
    #allocation6 [shape = 's32[1]{0}', space=sflag, size = 0x4, scoped, tag = 'scoped memory for tpu_custom_call.1']
    #allocation7 [shape = 'u8[512]{0}', space=smem, size = 0x200, scoped, tag = 'output window, operand 0, single buffered']
    %7 = vsyncpa [#allocation3], 0
    %8 = vsyncpa [#allocation6], 0
    %9 = vsyncpa [#allocation4], 0
    // Predicated region
    $region2: #{tpu_custom_call.1} parent=1 // pred_check
      _
    $region3: #{tpu_custom_call.1} parent=1 // pred_check_branch
      %11 = sbr.rel (0) target = $region5
    $region4: #{tpu_custom_call.1} parent=1 // pred_region
      %s13 = ssub.s32 256, 256
      %14 = vsyncadd [#allocation3], %s13
      %s15 = sshll.u32 [#allocation2], 4
      %s16 = int_to_ptr.vmem [resolvable:$true] %s15
      %21 = dma.hbm_to_vmem [thread:$0]  %s0, 256, %s16, [#allocation3], 128, 128, 8
    $region5: #{tpu_custom_call.1} parent=1 // pred_fallthru
      _
    // Predicated region
    $region6: #{tpu_custom_call.1} parent=1 // pred_check
      _
    $region7: #{tpu_custom_call.1} parent=1 // pred_check_branch
      %23 = sbr.rel (0) target = $region9
    $region8: #{tpu_custom_call.1} parent=1 // pred_region
      %s25 = ssub.s32 256, 256
      %26 = vsyncadd [#allocation6], %s25
      %s27 = sshll.u32 [#allocation5], 4
      %s28 = int_to_ptr.vmem [resolvable:$true] %s27
      %33 = dma.hbm_to_vmem [thread:$0]  %s1, 256, %s28, [#allocation6], 128, 128, 8
    $region9: #{tpu_custom_call.1} parent=1 // pred_fallthru
      _
    // Predicated region
    $region10: #{tpu_custom_call.1} parent=1 // pred_check
      _
    $region11: #{tpu_custom_call.1} parent=1 // pred_check_branch
      %35 = sbr.rel (0) target = $region13
    $region12: #{tpu_custom_call.1} parent=1 // pred_region
      %36 = dma.done [#allocation3], 256
    $region13: #{tpu_custom_call.1} parent=1 // pred_fallthru
      _
    // Predicated region
    $region14: #{tpu_custom_call.1} parent=1 // pred_check
      _
    $region15: #{tpu_custom_call.1} parent=1 // pred_check_branch
      %38 = sbr.rel (0) target = $region17
    $region16: #{tpu_custom_call.1} parent=1 // pred_region
      %39 = dma.done [#allocation6], 256
    $region17: #{tpu_custom_call.1} parent=1 // pred_fallthru
      _
    %v40 = vld [vmem:[#allocation2] sm:$0xff]
    %v41 = vld [vmem:[#allocation2 + $0x8] sm:$0xff]
    %v42 = vld [vmem:[#allocation5] sm:$0xff]
    %v43 = vld [vmem:[#allocation5 + $0x8] sm:$0xff]
    %v44 = vsub.f32 %v40, %v42
    %v45 = vsub.f32 %v41, %v43
    %v46 = vmul.f32 %v44, %v44
    %v47 = vmul.f32 %v45, %v45
    %v48 = vadd.f32 %v46, %v47
    %49 = vadd.xlane.f32.xlu0 %v48
    %v50 = vpop.xlane.xlu0 %49
    %v51 = vrot.slane %v50, 4
    %v52 = vadd.f32 %v50, %v51
    %v53 = vrot.slane %v52, 2
    %v54 = vadd.f32 %v52, %v53
    %v55 = vrot.slane %v54, 1
    %v56 = vadd.f32 %v54, %v55
    %s57 = vtos %v56
    %s58 = smul.f32 %s57, 0.00048828125
    %s59 = scalar_lea.smem [#allocation7], 0
    %60 = sst [smem:[%s59]] %s58
    // Predicated region
    $region18: #{tpu_custom_call.1} parent=1 // pred_check
      _
    $region19: #{tpu_custom_call.1} parent=1 // pred_check_branch
      %62 = sbr.rel (0) target = $region21
    $region20: #{tpu_custom_call.1} parent=1 // pred_region
      %s64 = ssub.s32 16, 16
      %65 = vsyncadd [#allocation4], %s64
      %68 = dma.smem_to_hbm [#allocation7], 16, %s2, [#allocation4]
    $region21: #{tpu_custom_call.1} parent=1 // pred_fallthru
      _
    // Predicated region
    $region22: #{tpu_custom_call.1} parent=1 // pred_check
      _
    $region23: #{tpu_custom_call.1} parent=1 // pred_check_branch
      %70 = sbr.rel (0) target = $region25
    $region24: #{tpu_custom_call.1} parent=1 // pred_region
      %71 = dma.done [#allocation4], 16
    $region25: #{tpu_custom_call.1} parent=1 // pred_fallthru
      _
    %72 = sfence
    %73 = vsyncpa [#allocation3], 1
    %74 = vsyncpa [#allocation6], 1
    %75 = vsyncpa [#allocation4], 1

</llo_original>
